<compile_context>
chip_gen: v5e
topology: v5e:2x2
jax: 0.10.0
libtpu: 0.0.40
codegen_flags: <defaults>
</compile_context>

<pallas_src>
import jax
import jax.numpy as jnp
from jax.experimental import pallas as pl
from jax.experimental.pallas import tpu as pltpu


# ----------------------------------------------------------------------------
# Pallas kernel: fused 1x1 conv + (folded, eval-mode) BatchNorm over the whole batch
# ----------------------------------------------------------------------------
def _conv_bn_kernel(x_ref, w_ref, b_ref, o_ref):
    # x_ref : (B*Cin,  N)      input pixels; rows = (batch, in-channel), lanes = pixels
    # w_ref : (B*Cout, B*Cin)  block-diagonal folded conv+BN weight
    # b_ref : (B*Cout, 1)      folded conv+BN bias per output row
    # o_ref : (B*Cout, N)
    x = x_ref[...]                                   # (S, N) one dense load
    w = w_ref[...]                                   # (R, S)
    R, S = w.shape
    N = x.shape[-1]

    # Unrolled VPU FMAs (no MXU): for each input row s, sublane-broadcast it to
    # all R output rows and scale by the matching weight column (lane-broadcast).
    acc = jnp.zeros((R, N), jnp.float32)
    for s in range(S):                               # S = B*Cin = 8, fully unrolled
        x_row = jnp.broadcast_to(x[s:s + 1, :], (R, N))
        acc = acc + w[:, s:s + 1] * x_row

    # Fused bias-add + single dense store of the full tile.
    o_ref[...] = acc + b_ref[...]


def hidden_conv_block_pallas(x_flat, w_bd, bias):
    R = w_bd.shape[0]
    N = x_flat.shape[-1]
    vmem = pl.BlockSpec(memory_space=pltpu.MemorySpace.VMEM)   # whole array in VMEM
    return pl.pallas_call(
        _conv_bn_kernel,
        out_shape=jax.ShapeDtypeStruct((R, N), jnp.float32),
        in_specs=[vmem, vmem, vmem],
        out_specs=vmem,
    )(x_flat, w_bd, bias)


# ----------------------------------------------------------------------------
# JAX glue: BN folding + layout (pure metadata reshapes only)
# ----------------------------------------------------------------------------
def hidden_conv_block_forward(x, params, eps=1e-5):
    B, Cin, H, W = x.shape
    w, bconv = params['w'], params['b']
    Cout = w.shape[0]

    # Fold eval-mode BatchNorm into the 1x1 conv:  y = s*(Wx + b - mean) + beta
    scale = params['gamma'] / jnp.sqrt(params['var'] + eps)
    w_f = (w * scale[:, None]).astype(jnp.float32)                    # (Cout, Cin)
    b_f = (scale * (bconv - params['mean']) + params['beta']).astype(jnp.float32)

    # Block-diagonal weight so the whole batch is one (B*Cout, B*Cin)x(B*Cin, N) mix.
    w_bd = jnp.kron(jnp.eye(B, dtype=jnp.float32), w_f)               # (B*Cout, B*Cin)
    bias = jnp.tile(b_f, B)[:, None]                                  # (B*Cout, 1)

    x_flat = x.reshape(B * Cin, H * W).astype(jnp.float32)            # metadata reshape
    y_flat = hidden_conv_block_pallas(x_flat, w_bd, bias)

    # TODO(synk): nn.Dropout(drop_out_ratio) is identity in eval mode.
    return y_flat.reshape(B, Cout, H, W)                              # metadata reshape


# ----------------------------------------------------------------------------
# Pure-JAX reference (literal translation of the PyTorch forward, eval mode)
# ----------------------------------------------------------------------------
def hidden_conv_block_reference(x, params, eps=1e-5):
    y = jnp.einsum('oc,bchw->bohw', params['w'], x) + params['b'][None, :, None, None]
    y = (params['gamma'][None, :, None, None]
         * (y - params['mean'][None, :, None, None])
         / jnp.sqrt(params['var'][None, :, None, None] + eps)
         + params['beta'][None, :, None, None])
    return y  # Dropout = identity in eval mode


# ----------------------------------------------------------------------------
if __name__ == "__main__":
    B, Cin, Cout, W = 2, 4, 4, 16          # in_channel = out_channel = 4, 16x16 spatial

    key = jax.random.PRNGKey(0)
    ks = jax.random.split(key, 8)
    x = jax.random.normal(ks[0], (B, Cin, W, W), jnp.float32)

    params = dict(
        # Conv2d(in_c, out_c, 1, 1, 0)
        w=0.5 * jax.random.normal(ks[1], (Cout, Cin), jnp.float32),
        b=0.1 * jax.random.normal(ks[2], (Cout,), jnp.float32),
        # BatchNorm2d(out_c) — eval-mode running statistics
        gamma=1.0 + 0.1 * jax.random.normal(ks[3], (Cout,), jnp.float32),
        beta=0.1 * jax.random.normal(ks[4], (Cout,), jnp.float32),
        mean=0.1 * jax.random.normal(ks[5], (Cout,), jnp.float32),
        var=0.5 + jax.random.uniform(ks[6], (Cout,), jnp.float32),
    )

    out = jax.block_until_ready(hidden_conv_block_forward(x, params))
    ref = jax.block_until_ready(hidden_conv_block_reference(x, params))

    assert out.shape == (B, Cout, W, W)
    max_err = float(jnp.max(jnp.abs(out - ref)))
    assert max_err < 1e-4, f"mismatch vs reference: {max_err}"
    print("KERNEL_OK")
</pallas_src>

<mosaic_0001>
module attributes {stable_mosaic.version = 11 : i64} {
  func.func @_conv_bn_kernel(%arg0: memref<8x256xf32, #tpu.memory_space<vmem>>, %arg1: memref<8x8xf32, #tpu.memory_space<vmem>>, %arg2: memref<8x1xf32, #tpu.memory_space<vmem>>, %arg3: memref<8x256xf32, #tpu.memory_space<vmem>>) attributes {dimension_semantics = [], scalar_prefetch = 0 : i64, scratch_operands = 0 : i64, tpu.core_type = #tpu.core_type<tc>} {
    %c0 = arith.constant 0 : index
    %c0_0 = arith.constant 0 : index
    %0 = vector.load %arg0[%c0, %c0_0] : memref<8x256xf32, #tpu.memory_space<vmem>>, vector<8x256xf32>
    %c0_1 = arith.constant 0 : index
    %c0_2 = arith.constant 0 : index
    %1 = vector.load %arg1[%c0_1, %c0_2] : memref<8x8xf32, #tpu.memory_space<vmem>>, vector<8x8xf32>
    %cst = arith.constant 0.000000e+00 : f32
    %2 = vector.broadcast %cst : f32 to vector<8x256xf32>
    %3 = vector.extract_strided_slice %0 {offsets = [0, 0], sizes = [1, 256], strides = [1, 1]} : vector<8x256xf32> to vector<1x256xf32>
    %4 = vector.shape_cast %3 : vector<1x256xf32> to vector<1x256xf32>
    %5 = vector.broadcast %4 : vector<1x256xf32> to vector<8x256xf32>
    %6 = vector.extract_strided_slice %1 {offsets = [0, 0], sizes = [8, 1], strides = [1, 1]} : vector<8x8xf32> to vector<8x1xf32>
    %7 = vector.broadcast %6 : vector<8x1xf32> to vector<8x256xf32>
    %8 = arith.mulf %7, %5 : vector<8x256xf32>
    %9 = arith.addf %2, %8 : vector<8x256xf32>
    %10 = vector.extract_strided_slice %0 {offsets = [1, 0], sizes = [1, 256], strides = [1, 1]} : vector<8x256xf32> to vector<1x256xf32>
    %11 = vector.shape_cast %10 : vector<1x256xf32> to vector<1x256xf32>
    %12 = vector.broadcast %11 : vector<1x256xf32> to vector<8x256xf32>
    %13 = vector.extract_strided_slice %1 {offsets = [0, 1], sizes = [8, 1], strides = [1, 1]} : vector<8x8xf32> to vector<8x1xf32>
    %14 = vector.broadcast %13 : vector<8x1xf32> to vector<8x256xf32>
    %15 = arith.mulf %14, %12 : vector<8x256xf32>
    %16 = arith.addf %9, %15 : vector<8x256xf32>
    %17 = vector.extract_strided_slice %0 {offsets = [2, 0], sizes = [1, 256], strides = [1, 1]} : vector<8x256xf32> to vector<1x256xf32>
    %18 = vector.shape_cast %17 : vector<1x256xf32> to vector<1x256xf32>
    %19 = vector.broadcast %18 : vector<1x256xf32> to vector<8x256xf32>
    %20 = vector.extract_strided_slice %1 {offsets = [0, 2], sizes = [8, 1], strides = [1, 1]} : vector<8x8xf32> to vector<8x1xf32>
    %21 = vector.broadcast %20 : vector<8x1xf32> to vector<8x256xf32>
    %22 = arith.mulf %21, %19 : vector<8x256xf32>
    %23 = arith.addf %16, %22 : vector<8x256xf32>
    %24 = vector.extract_strided_slice %0 {offsets = [3, 0], sizes = [1, 256], strides = [1, 1]} : vector<8x256xf32> to vector<1x256xf32>
    %25 = vector.shape_cast %24 : vector<1x256xf32> to vector<1x256xf32>
    %26 = vector.broadcast %25 : vector<1x256xf32> to vector<8x256xf32>
    %27 = vector.extract_strided_slice %1 {offsets = [0, 3], sizes = [8, 1], strides = [1, 1]} : vector<8x8xf32> to vector<8x1xf32>
    %28 = vector.broadcast %27 : vector<8x1xf32> to vector<8x256xf32>
    %29 = arith.mulf %28, %26 : vector<8x256xf32>
    %30 = arith.addf %23, %29 : vector<8x256xf32>
    %31 = vector.extract_strided_slice %0 {offsets = [4, 0], sizes = [1, 256], strides = [1, 1]} : vector<8x256xf32> to vector<1x256xf32>
    %32 = vector.shape_cast %31 : vector<1x256xf32> to vector<1x256xf32>
    %33 = vector.broadcast %32 : vector<1x256xf32> to vector<8x256xf32>
    %34 = vector.extract_strided_slice %1 {offsets = [0, 4], sizes = [8, 1], strides = [1, 1]} : vector<8x8xf32> to vector<8x1xf32>
    %35 = vector.broadcast %34 : vector<8x1xf32> to vector<8x256xf32>
    %36 = arith.mulf %35, %33 : vector<8x256xf32>
    %37 = arith.addf %30, %36 : vector<8x256xf32>
    %38 = vector.extract_strided_slice %0 {offsets = [5, 0], sizes = [1, 256], strides = [1, 1]} : vector<8x256xf32> to vector<1x256xf32>
    %39 = vector.shape_cast %38 : vector<1x256xf32> to vector<1x256xf32>
    %40 = vector.broadcast %39 : vector<1x256xf32> to vector<8x256xf32>
    %41 = vector.extract_strided_slice %1 {offsets = [0, 5], sizes = [8, 1], strides = [1, 1]} : vector<8x8xf32> to vector<8x1xf32>
    %42 = vector.broadcast %41 : vector<8x1xf32> to vector<8x256xf32>
    %43 = arith.mulf %42, %40 : vector<8x256xf32>
    %44 = arith.addf %37, %43 : vector<8x256xf32>
    %45 = vector.extract_strided_slice %0 {offsets = [6, 0], sizes = [1, 256], strides = [1, 1]} : vector<8x256xf32> to vector<1x256xf32>
    %46 = vector.shape_cast %45 : vector<1x256xf32> to vector<1x256xf32>
    %47 = vector.broadcast %46 : vector<1x256xf32> to vector<8x256xf32>
    %48 = vector.extract_strided_slice %1 {offsets = [0, 6], sizes = [8, 1], strides = [1, 1]} : vector<8x8xf32> to vector<8x1xf32>
    %49 = vector.broadcast %48 : vector<8x1xf32> to vector<8x256xf32>
    %50 = arith.mulf %49, %47 : vector<8x256xf32>
    %51 = arith.addf %44, %50 : vector<8x256xf32>
    %52 = vector.extract_strided_slice %0 {offsets = [7, 0], sizes = [1, 256], strides = [1, 1]} : vector<8x256xf32> to vector<1x256xf32>
    %53 = vector.shape_cast %52 : vector<1x256xf32> to vector<1x256xf32>
    %54 = vector.broadcast %53 : vector<1x256xf32> to vector<8x256xf32>
    %55 = vector.extract_strided_slice %1 {offsets = [0, 7], sizes = [8, 1], strides = [1, 1]} : vector<8x8xf32> to vector<8x1xf32>
    %56 = vector.broadcast %55 : vector<8x1xf32> to vector<8x256xf32>
    %57 = arith.mulf %56, %54 : vector<8x256xf32>
    %58 = arith.addf %51, %57 : vector<8x256xf32>
    %c0_3 = arith.constant 0 : index
    %c0_4 = arith.constant 0 : index
    %59 = vector.load %arg2[%c0_3, %c0_4] : memref<8x1xf32, #tpu.memory_space<vmem>>, vector<8x1xf32>
    %60 = vector.broadcast %59 : vector<8x1xf32> to vector<8x256xf32>
    %61 = arith.addf %58, %60 : vector<8x256xf32>
    %c0_5 = arith.constant 0 : index
    %c0_6 = arith.constant 0 : index
    %62 = vector.load %arg3[%c0_5, %c0_6] : memref<8x256xf32, #tpu.memory_space<vmem>>, vector<8x256xf32>
    tpu.vector_store %arg3[%c0_5, %c0_6], %61 {strides = array<i32>} : memref<8x256xf32, #tpu.memory_space<vmem>>, vector<8x256xf32>,
    return
  }
}

</mosaic_0001>

<llo_original>
// kernel: tpu_custom_call.1
$region0: #{tpu_custom_call.1}
  #allocation0 [shape = 'u32[]', space=smem, size = 0x4, offset = 0x4, fixed_abs, tag = 'smem constant byte address 0x4 - core index']
  #allocation1 [shape = 'u32[72,128]{1,0:T(1,128)}', space=vmem, size = 0x9000, scoped, tag = 'internal scratch']
  %s0 = inlined_call_operand.hbm [shape: f32[8,256], index: 0, kind: input, shape index: {}]
  %s1 = inlined_call_operand.vmem [shape: f32[8,8], index: 1, kind: input, shape index: {}]
  %s2 = inlined_call_operand.vmem [shape: f32[8,1], index: 2, kind: input, shape index: {}]
  %s3 = inlined_call_operand.hbm [shape: f32[8,256], index: 3, kind: output, shape index: {}]
  %s4 = sld [smem:[#allocation0]]
  $region26: #{tpu_custom_call.1} parent=0
    _
  %s6 = ssub.s32 1, %s4
  %s7 = scalar_select 0, %s6, %s4
  $region1: #{tpu_custom_call.1} parent=0
    #allocation2 [shape = 'u8[8192]{0}', space=vmem, size = 0x2000, scoped, tag = 'input window, operand 0, single buffered']
    #allocation3 [shape = 's32[1]{0}', space=sflag, size = 0x4, scoped, tag = 'scoped memory for tpu_custom_call.1']
    #allocation4 [shape = 's32[1]{0}', space=sflag, size = 0x4, scoped, tag = 'scoped memory for tpu_custom_call.1']
    #allocation5 [shape = 'u8[8192]{0}', space=vmem, size = 0x2000, scoped, tag = 'output window, operand 0, single buffered']
    %8 = vsyncpa [#allocation3], 0
    %9 = vsyncpa [#allocation4], 0
    // Predicated region
    $region2: #{tpu_custom_call.1} parent=1 // pred_check
      _
    $region3: #{tpu_custom_call.1} parent=1 // pred_check_branch
      %11 = sbr.rel (0) target = $region5
    $region4: #{tpu_custom_call.1} parent=1 // pred_region
      %13 = vsyncadd [#allocation3], 0
      %s15 = sshll.u32 %s0, 4
      %s16 = int_to_ptr.hbm [resolvable:$true] %s15
      %s17 = sshll.u32 [#allocation2], 4
      %s18 = int_to_ptr.vmem [resolvable:$true] %s17
      %20 = dma.hbm_to_vmem [thread:$0]  %s16, 256, %s18, [#allocation3]
    $region5: #{tpu_custom_call.1} parent=1 // pred_fallthru
      _
    // Predicated region
    $region6: #{tpu_custom_call.1} parent=1 // pred_check
      _
    $region7: #{tpu_custom_call.1} parent=1 // pred_check_branch
      %22 = sbr.rel (0) target = $region9
    $region8: #{tpu_custom_call.1} parent=1 // pred_region
      _
    $region9: #{tpu_custom_call.1} parent=1 // pred_fallthru
      _
    // Predicated region
    $region10: #{tpu_custom_call.1} parent=1 // pred_check
      _
    $region11: #{tpu_custom_call.1} parent=1 // pred_check_branch
      %24 = sbr.rel (0) target = $region13
    $region12: #{tpu_custom_call.1} parent=1 // pred_region
      _
    $region13: #{tpu_custom_call.1} parent=1 // pred_fallthru
      _
    // Predicated region
    $region14: #{tpu_custom_call.1} parent=1 // pred_check
      _
    $region15: #{tpu_custom_call.1} parent=1 // pred_check_branch
      %26 = sbr.rel (0) target = $region17
    $region16: #{tpu_custom_call.1} parent=1 // pred_region
      %28 = dma.done [#allocation3], 256
    $region17: #{tpu_custom_call.1} parent=1 // pred_fallthru
      _
    %v29 = vld [vmem:[#allocation2] sm:$0xff]
    %v30 = vld [vmem:[#allocation2 + $0x8] sm:$0xff]
    %v31 = vld [vmem:[%s1] sm:$0xff]
    %v32 = vperm.slane %v29, 0
    %v33 = vperm.slane %v30, 0
    %35 = vset.pattern.permute.xlu0 0
    %36 = vperm.xlu0 %35, %v31
    %v37 = vpop.permute.xlu0 %36
    %v39 = vmul.f32 %v37, %v32
    %v40 = vmul.f32 %v37, %v33
    %v41 = vadd.f32 %v39, 0.0
    %v42 = vadd.f32 %v40, 0.0
    %v43 = vperm.slane %v29, 1
    %v44 = vperm.slane %v30, 1
    %45 = vset.pattern.permute.xlu0 1
    %46 = vperm.xlu0 %45, %v31
    %v47 = vpop.permute.xlu0 %46
    %v49 = vmul.f32 %v47, %v43
    %v50 = vmul.f32 %v47, %v44
    %v51 = vadd.f32 %v41, %v49
    %v52 = vadd.f32 %v42, %v50
    %v53 = vperm.slane %v29, 2
    %v54 = vperm.slane %v30, 2
    %55 = vset.pattern.permute.xlu0 2
    %56 = vperm.xlu0 %55, %v31
    %v57 = vpop.permute.xlu0 %56
    %v59 = vmul.f32 %v57, %v53
    %v60 = vmul.f32 %v57, %v54
    %v61 = vadd.f32 %v51, %v59
    %v62 = vadd.f32 %v52, %v60
    %v63 = vperm.slane %v29, 3
    %v64 = vperm.slane %v30, 3
    %65 = vset.pattern.permute.xlu0 3
    %66 = vperm.xlu0 %65, %v31
    %v67 = vpop.permute.xlu0 %66
    %v69 = vmul.f32 %v67, %v63
    %v70 = vmul.f32 %v67, %v64
    %v71 = vadd.f32 %v61, %v69
    %v72 = vadd.f32 %v62, %v70
    %v73 = vperm.slane %v29, 4
    %v74 = vperm.slane %v30, 4
    %75 = vset.pattern.permute.xlu0 4
    %76 = vperm.xlu0 %75, %v31
    %v77 = vpop.permute.xlu0 %76
    %v79 = vmul.f32 %v77, %v73
    %v80 = vmul.f32 %v77, %v74
    %v81 = vadd.f32 %v71, %v79
    %v82 = vadd.f32 %v72, %v80
    %v83 = vperm.slane %v29, 5
    %v84 = vperm.slane %v30, 5
    %85 = vset.pattern.permute.xlu0 5
    %86 = vperm.xlu0 %85, %v31
    %v87 = vpop.permute.xlu0 %86
    %v89 = vmul.f32 %v87, %v83
    %v90 = vmul.f32 %v87, %v84
    %v91 = vadd.f32 %v81, %v89
    %v92 = vadd.f32 %v82, %v90
    %v93 = vperm.slane %v29, 6
    %v94 = vperm.slane %v30, 6
    %95 = vset.pattern.permute.xlu0 6
    %96 = vperm.xlu0 %95, %v31
    %v97 = vpop.permute.xlu0 %96
    %v99 = vmul.f32 %v97, %v93
    %v100 = vmul.f32 %v97, %v94
    %v101 = vadd.f32 %v91, %v99
    %v102 = vadd.f32 %v92, %v100
    %v103 = vperm.slane %v29, 7
    %v104 = vperm.slane %v30, 7
    %105 = vset.pattern.permute.xlu0 7
    %106 = vperm.xlu0 %105, %v31
    %v107 = vpop.permute.xlu0 %106
    %v109 = vmul.f32 %v107, %v103
    %v110 = vmul.f32 %v107, %v104
    %v111 = vadd.f32 %v101, %v109
    %v112 = vadd.f32 %v102, %v110
    %v113 = vld [vmem:[%s2] sm:$0xff]
    %115 = vset.pattern.permute.xlu0 0
    %116 = vperm.xlu0 %115, %v113
    %v117 = vpop.permute.xlu0 %116
    %v119 = vadd.f32 %v111, %v117
    %v120 = vadd.f32 %v112, %v117
    %121 = vst [vmem:[#allocation5] sm:$0xff] %v119
    %122 = vst [vmem:[#allocation5 + $0x8] sm:$0xff] %v120
    // Predicated region
    $region18: #{tpu_custom_call.1} parent=1 // pred_check
      _
    $region19: #{tpu_custom_call.1} parent=1 // pred_check_branch
      %124 = sbr.rel (0) target = $region21
    $region20: #{tpu_custom_call.1} parent=1 // pred_region
      %126 = vsyncadd [#allocation4], 0
      %s128 = sshll.u32 [#allocation5], 4
      %s129 = int_to_ptr.vmem [resolvable:$true] %s128
      %s130 = sshll.u32 %s3, 4
      %s131 = int_to_ptr.hbm [resolvable:$true] %s130
      %133 = dma.vmem_to_hbm [thread:$0]  %s129, 256, %s131, [#allocation4]
    $region21: #{tpu_custom_call.1} parent=1 // pred_fallthru
      _
    // Predicated region
    $region22: #{tpu_custom_call.1} parent=1 // pred_check
      _
    $region23: #{tpu_custom_call.1} parent=1 // pred_check_branch
      %135 = sbr.rel (0) target = $region25
    $region24: #{tpu_custom_call.1} parent=1 // pred_region
      %137 = dma.done [#allocation4], 256
    $region25: #{tpu_custom_call.1} parent=1 // pred_fallthru
      _
    %138 = vsyncpa [#allocation3], 1
    %139 = vsyncpa [#allocation4], 1

</llo_original>
